<compile_context>
chip_gen: v5e
topology: v5e:2x2
jax: 0.10.0
libtpu: 0.0.40
codegen_flags: <defaults>
</compile_context>

<pallas_src>
import jax
import jax.numpy as jnp
from jax.experimental import pallas as pl
from jax.experimental.pallas import tpu as pltpu


C_IN = 64           # channels of each of bev / rv / point feature
C_MID = 64          # conv1 out channels
C_OUT = 96          # conv2 out channels
TP_TARGET = 1024    # pixel tile (lanes); on the HBM-roofline plateau


def _round_up(x, m):
    return ((x + m - 1) // m) * m


def _choose_tiling(P, tp_target=TP_TARGET):
    """Pick (TP, P_pad): lane-dense tile and padded pixel extent."""
    P128 = _round_up(P, 128)
    if P128 <= tp_target:
        return P128, P128
    # Prefer a tile >= 512 that divides the 128-rounded pixel count: avoids a
    # full wrapper-side pad/copy of the inputs while keeping ~85%+ of HBM BW.
    for tp in range(tp_target, 511, -128):
        if P128 % tp == 0:
            return tp, P128
    # Fall back: big tile, pad the pixel axis up to a multiple of it.
    return tp_target, _round_up(P, tp_target)


def _pointfusion_kernel(bev_ref, rv_ref, pt_ref, w_ref, bf_ref, o_ref):
    # bev/rv/pt refs: (1, 64, TP); w_ref: (3, 96, 64); bf_ref: (96, 1);
    # o_ref: (1, 96, TP).  Fused-conv matmul as a sum of three MXU matmuls
    # against statically indexed weight blocks (no in-kernel concat/relayout).
    y = jnp.dot(w_ref[0], bev_ref[0], preferred_element_type=jnp.float32)
    y += jnp.dot(w_ref[1], rv_ref[0], preferred_element_type=jnp.float32)
    y += jnp.dot(w_ref[2], pt_ref[0], preferred_element_type=jnp.float32)
    y += bf_ref[...]                    # (96, 1) broadcast over lanes
    o_ref[0] = y.astype(o_ref.dtype)


def pointfusion_forward(bev, rv, pt, w1, b1, w2, b2, tp_target=TP_TARGET):
    """bev, rv, pt: (B, 64, H, W) float32. Returns (B, 96, H, W).

    w1: (192, 64), b1: (64,), w2: (64, 96), b2: (96,)  (x @ W convention).
    """
    B, C, H, W = bev.shape
    assert C == C_IN and rv.shape == bev.shape and pt.shape == bev.shape
    P = H * W

    # --- weight prep: fold conv1 & conv2 (no activation in between) ---------
    wf = w1 @ w2                                   # (192, 96)
    bf = b1 @ w2 + b2                              # (96,)
    wft = wf.T                                     # (96, 192)  out_c x in_c
    # Pre-split into per-input weight blocks: (3, 96, 64).
    w_stack = jnp.stack(
        [wft[:, 0:C_IN], wft[:, C_IN:2 * C_IN], wft[:, 2 * C_IN:3 * C_IN]],
        axis=0)
    bf2d = bf.reshape(C_OUT, 1)

    # --- pixel-axis tiling (NCHW stays NCHW; no transposes) -----------------
    TP, P_pad = _choose_tiling(P, tp_target)

    def to_cp(x):                                  # (B, 64, H, W) -> (B, 64, P)
        return x.reshape(B, C_IN, P)

    xb, xr, xp = to_cp(bev), to_cp(rv), to_cp(pt)
    if P_pad != P:
        pad = ((0, 0), (0, 0), (0, P_pad - P))
        xb = jnp.pad(xb, pad)
        xr = jnp.pad(xr, pad)
        xp = jnp.pad(xp, pad)

    grid = (B, P_pad // TP)
    in_spec = pl.BlockSpec((1, C_IN, TP), lambda b, p: (b, 0, p))

    out_cp = pl.pallas_call(
        _pointfusion_kernel,
        out_shape=jax.ShapeDtypeStruct((B, C_OUT, P_pad), bev.dtype),
        grid_spec=pltpu.PrefetchScalarGridSpec(
            num_scalar_prefetch=0,
            grid=grid,
            in_specs=[
                in_spec,                                               # bev
                in_spec,                                               # rv
                in_spec,                                               # point
                pl.BlockSpec((3, C_OUT, C_IN), lambda b, p: (0, 0, 0)),  # Wf stack
                pl.BlockSpec((C_OUT, 1), lambda b, p: (0, 0)),           # fused bias
            ],
            out_specs=pl.BlockSpec((1, C_OUT, TP), lambda b, p: (b, 0, p)),
        ),
        compiler_params=pltpu.CompilerParams(
            dimension_semantics=("parallel", "parallel")),
    )(xb, xr, xp, w_stack, bf2d)

    if P_pad != P:
        out_cp = out_cp[:, :, :P]
    return out_cp.reshape(B, C_OUT, H, W)


def init_params(key):
    """Deterministic init matching nn.Conv2d shapes (weights stored transposed
    for x @ W convention: conv weight (out, in, 1, 1) -> (in, out))."""
    k1, k2, k3, k4 = jax.random.split(key, 4)
    fan1 = 3 * C_IN
    fan2 = C_MID
    w1 = jax.random.normal(k1, (fan1, C_MID), jnp.float32) * (1.0 / jnp.sqrt(fan1))
    b1 = jax.random.normal(k2, (C_MID,), jnp.float32) * 0.01
    w2 = jax.random.normal(k3, (fan2, C_OUT), jnp.float32) * (1.0 / jnp.sqrt(fan2))
    b2 = jax.random.normal(k4, (C_OUT,), jnp.float32) * 0.01
    return w1, b1, w2, b2


if __name__ == "__main__":
    key = jax.random.PRNGKey(0)
    kb, kr, kp, kw = jax.random.split(key, 4)

    B, H, W = 2, 8, 8
    bev = jax.random.normal(kb, (B, C_IN, H, W), jnp.float32)
    rv = jax.random.normal(kr, (B, C_IN, H, W), jnp.float32)
    pt = jax.random.normal(kp, (B, C_IN, H, W), jnp.float32)

    w1, b1, w2, b2 = init_params(kw)

    out = pointfusion_forward(bev, rv, pt, w1, b1, w2, b2)
    out = jax.block_until_ready(out)
    assert out.shape == (B, C_OUT, H, W), out.shape

    # Reference check in plain JAX (unfused 1x1 convs as einsums).
    x = jnp.concatenate([bev, rv, pt], axis=1)                        # (B,192,H,W)
    h = jnp.einsum("bchw,cm->bmhw", x, w1) + b1[None, :, None, None]
    ref = jnp.einsum("bchw,cm->bmhw", h, w2) + b2[None, :, None, None]
    assert jnp.allclose(out, ref, atol=1e-4, rtol=1e-4)

    print("KERNEL_OK")
</pallas_src>

<mosaic_0001>
module attributes {stable_mosaic.version = 11 : i64} {
  func.func @_pointfusion_kernel(%arg0: i32, %arg1: i32, %arg2: memref<1x64x128xf32, #tpu.memory_space<vmem>>, %arg3: memref<1x64x128xf32, #tpu.memory_space<vmem>>, %arg4: memref<1x64x128xf32, #tpu.memory_space<vmem>>, %arg5: memref<3x96x64xf32, #tpu.memory_space<vmem>>, %arg6: memref<96x1xf32, #tpu.memory_space<vmem>>, %arg7: memref<1x96x128xf32, #tpu.memory_space<vmem>>) attributes {dimension_semantics = [#tpu.dimension_semantics<parallel>, #tpu.dimension_semantics<parallel>], iteration_bounds = array<i64: 2, 1>, scalar_prefetch = 0 : i64, scratch_operands = 0 : i64, tpu.core_type = #tpu.core_type<tc>, window_params = [{transform_indices = @transform_0, window_bounds = array<i64: 1, 64, 128>}, {transform_indices = @transform_1, window_bounds = array<i64: 1, 64, 128>}, {transform_indices = @transform_2, window_bounds = array<i64: 1, 64, 128>}, {pipeline_mode = #tpu.pipeline_mode<synchronous>, transform_indices = @transform_3, window_bounds = array<i64: 3, 96, 64>}, {pipeline_mode = #tpu.pipeline_mode<synchronous>, transform_indices = @transform_4, window_bounds = array<i64: 96, 1>}, {transform_indices = @transform_5, window_bounds = array<i64: 1, 96, 128>}]} {
    %c0 = arith.constant 0 : index
    %c0_0 = arith.constant 0 : index
    %c0_1 = arith.constant 0 : index
    %0 = vector.load %arg5[%c0, %c0_0, %c0_1] : memref<3x96x64xf32, #tpu.memory_space<vmem>>, vector<1x96x64xf32>
    %1 = vector.shape_cast %0 : vector<1x96x64xf32> to vector<96x64xf32>
    %c0_2 = arith.constant 0 : index
    %c0_3 = arith.constant 0 : index
    %c0_4 = arith.constant 0 : index
    %2 = vector.load %arg2[%c0_2, %c0_3, %c0_4] : memref<1x64x128xf32, #tpu.memory_space<vmem>>, vector<1x64x128xf32>
    %3 = vector.shape_cast %2 : vector<1x64x128xf32> to vector<64x128xf32>
    %cst = arith.constant dense<0.000000e+00> : vector<96x128xf32>
    %4 = tpu.matmul %1, %3, %cst {dimension_numbers = #tpu.dot_dimension_numbers<[1], [0], [0], [1], [0, 0, 1, 1], [], []>} : vector<96x64xf32>, vector<64x128xf32>, vector<96x128xf32> -> vector<96x128xf32>
    %c1 = arith.constant 1 : index
    %c0_5 = arith.constant 0 : index
    %c0_6 = arith.constant 0 : index
    %5 = vector.load %arg5[%c1, %c0_5, %c0_6] : memref<3x96x64xf32, #tpu.memory_space<vmem>>, vector<1x96x64xf32>
    %6 = vector.shape_cast %5 : vector<1x96x64xf32> to vector<96x64xf32>
    %c0_7 = arith.constant 0 : index
    %c0_8 = arith.constant 0 : index
    %c0_9 = arith.constant 0 : index
    %7 = vector.load %arg3[%c0_7, %c0_8, %c0_9] : memref<1x64x128xf32, #tpu.memory_space<vmem>>, vector<1x64x128xf32>
    %8 = vector.shape_cast %7 : vector<1x64x128xf32> to vector<64x128xf32>
    %cst_10 = arith.constant dense<0.000000e+00> : vector<96x128xf32>
    %9 = tpu.matmul %6, %8, %cst_10 {dimension_numbers = #tpu.dot_dimension_numbers<[1], [0], [0], [1], [0, 0, 1, 1], [], []>} : vector<96x64xf32>, vector<64x128xf32>, vector<96x128xf32> -> vector<96x128xf32>
    %10 = arith.addf %4, %9 : vector<96x128xf32>
    %c2 = arith.constant 2 : index
    %c0_11 = arith.constant 0 : index
    %c0_12 = arith.constant 0 : index
    %11 = vector.load %arg5[%c2, %c0_11, %c0_12] : memref<3x96x64xf32, #tpu.memory_space<vmem>>, vector<1x96x64xf32>
    %12 = vector.shape_cast %11 : vector<1x96x64xf32> to vector<96x64xf32>
    %c0_13 = arith.constant 0 : index
    %c0_14 = arith.constant 0 : index
    %c0_15 = arith.constant 0 : index
    %13 = vector.load %arg4[%c0_13, %c0_14, %c0_15] : memref<1x64x128xf32, #tpu.memory_space<vmem>>, vector<1x64x128xf32>
    %14 = vector.shape_cast %13 : vector<1x64x128xf32> to vector<64x128xf32>
    %cst_16 = arith.constant dense<0.000000e+00> : vector<96x128xf32>
    %15 = tpu.matmul %12, %14, %cst_16 {dimension_numbers = #tpu.dot_dimension_numbers<[1], [0], [0], [1], [0, 0, 1, 1], [], []>} : vector<96x64xf32>, vector<64x128xf32>, vector<96x128xf32> -> vector<96x128xf32>
    %16 = arith.addf %10, %15 : vector<96x128xf32>
    %c0_17 = arith.constant 0 : index
    %c0_18 = arith.constant 0 : index
    %17 = vector.load %arg6[%c0_17, %c0_18] : memref<96x1xf32, #tpu.memory_space<vmem>>, vector<96x1xf32>
    %18 = vector.broadcast %17 : vector<96x1xf32> to vector<96x128xf32>
    %19 = arith.addf %16, %18 : vector<96x128xf32>
    %c0_19 = arith.constant 0 : index
    %c0_20 = arith.constant 0 : index
    %c0_21 = arith.constant 0 : index
    %20 = vector.load %arg7[%c0_19, %c0_20, %c0_21] : memref<1x96x128xf32, #tpu.memory_space<vmem>>, vector<1x96x128xf32>
    %21 = vector.shape_cast %20 : vector<1x96x128xf32> to vector<96x128xf32>
    %22 = vector.shape_cast %19 : vector<96x128xf32> to vector<1x96x128xf32>
    tpu.vector_store %arg7[%c0_19, %c0_20, %c0_21], %22 {strides = array<i32>} : memref<1x96x128xf32, #tpu.memory_space<vmem>>, vector<1x96x128xf32>,
    return
  }
  func.func @transform_0(%arg0: i32, %arg1: i32) -> (i32, i32, i32) {
    %c0_i32 = arith.constant 0 : i32
    %c0_i32_0 = arith.constant 0 : i32
    return %arg0, %c0_i32, %arg1 : i32, i32, i32
  }
  func.func @transform_1(%arg0: i32, %arg1: i32) -> (i32, i32, i32) {
    %c0_i32 = arith.constant 0 : i32
    %c0_i32_0 = arith.constant 0 : i32
    return %arg0, %c0_i32, %arg1 : i32, i32, i32
  }
  func.func @transform_2(%arg0: i32, %arg1: i32) -> (i32, i32, i32) {
    %c0_i32 = arith.constant 0 : i32
    %c0_i32_0 = arith.constant 0 : i32
    return %arg0, %c0_i32, %arg1 : i32, i32, i32
  }
  func.func @transform_3(%arg0: i32, %arg1: i32) -> (i32, i32, i32) {
    %c0_i32 = arith.constant 0 : i32
    %c0_i32_0 = arith.constant 0 : i32
    %c0_i32_1 = arith.constant 0 : i32
    %c0_i32_2 = arith.constant 0 : i32
    return %c0_i32, %c0_i32_0, %c0_i32_1 : i32, i32, i32
  }
  func.func @transform_4(%arg0: i32, %arg1: i32) -> (i32, i32) {
    %c0_i32 = arith.constant 0 : i32
    %c0_i32_0 = arith.constant 0 : i32
    %c0_i32_1 = arith.constant 0 : i32
    return %c0_i32, %c0_i32_0 : i32, i32
  }
  func.func @transform_5(%arg0: i32, %arg1: i32) -> (i32, i32, i32) {
    %c0_i32 = arith.constant 0 : i32
    %c0_i32_0 = arith.constant 0 : i32
    return %arg0, %c0_i32, %arg1 : i32, i32, i32
  }
}

</mosaic_0001>

<llo_original>
// kernel: tpu_custom_call.1
$region0: #{tpu_custom_call.1}
  #allocation0 [shape = 'u32[]', space=smem, size = 0x4, offset = 0x4, fixed_abs, tag = 'smem constant byte address 0x4 - core index']
  #allocation1 [shape = 'u32[72,128]{1,0:T(1,128)}', space=vmem, size = 0x9000, scoped, tag = 'internal scratch']
  %s0 = inlined_call_operand.vmem [shape: f32[2,64,128], index: 0, kind: input, shape index: {}]
  %s1 = inlined_call_operand.vmem [shape: f32[2,64,128], index: 1, kind: input, shape index: {}]
  %s2 = inlined_call_operand.vmem [shape: f32[2,64,128], index: 2, kind: input, shape index: {}]
  %s3 = inlined_call_operand.vmem [shape: f32[3,96,64], index: 3, kind: input, shape index: {}]
  %s4 = inlined_call_operand.vmem [shape: f32[96,1], index: 4, kind: input, shape index: {}]
  %s5 = inlined_call_operand.hbm [shape: f32[2,96,128], index: 5, kind: output, shape index: {}]
  %s6 = sld [smem:[#allocation0]]
  $region53: #{tpu_custom_call.1} parent=0
    _
  %s8 = ssub.s32 1, %s6
  %s9 = scalar_select 0, %s8, %s6
  $region1: #{tpu_custom_call.1} parent=0
    #allocation2 [shape = 'u8[98304]{0}', space=vmem, size = 0x18000, scoped, tag = 'output window, operand 0']
    #allocation3 [shape = 's32[2]{0}', space=sflag, size = 0x8, scoped, tag = 'scoped memory for tpu_custom_call.1']
    %10 = vsyncpa [#allocation3], 0
    %s11 = scalar_lea.sflag [#allocation3], 1
    %12 = vsyncpa %s11, 0
    loop: start=0, step=1, limit=4
    $region2: #{tpu_custom_call.1} parent=1 // loop_pre_header
      _
    $region3: #{tpu_custom_call.1} parent=1 // loop_header
      %s14 = sphi 0, %s18
      %p15 = scmp.ge.s32.totalorder %s14, 4
      %s21 = sphi 0, %s33
      %s22 = sphi 0, %s29
      %s23 = sphi 0, %s21
      %s24 = sphi 0, %s22
      %s25 = sphi 0, %s23
      %s26 = sphi 0, %s24
      %s38 = sphi 0, %s40
      %s41 = sphi 0, %s38
      %s42 = sphi 0, %s41
      %s58 = sphi 0, %s42
      %s66 = sphi 0, %s68
      %s69 = sphi 0, %s66
      %s70 = sphi 0, %s69
      %s86 = sphi 0, %s70
      %s94 = sphi 0, %s96
      %s97 = sphi 0, %s94
      %s98 = sphi 0, %s97
      %s114 = sphi 0, %s98
      %s118 = sphi 0, %s118
      %s120 = sphi 0, %s118
      %s121 = sphi 0, %s120
      %s135 = sphi 0, %s121
      %s139 = sphi 0, %s139
      %s141 = sphi 0, %s139
      %s142 = sphi 0, %s141
      %s156 = sphi 0, %s142
      %s164 = sphi 0, %s166
      %s167 = sphi 0, %s164
      %s168 = sphi 0, %s167
      %s184 = sphi 0, %s168
    $region4: #{tpu_custom_call.1} parent=1 // loop_header_branch
      %17 = sbr.rel (%p15) target = $region8
    $region5: #{tpu_custom_call.1} parent=1 // loop_body
      %s19 = ssub.s32 %s14, 1
      %s20 = ssub.s32 %s14, 2
      %s27 = sadd.s32 1, %s22
      %p28 = scmp.ge.s32.totalorder %s27, 1
      %s29 = scalar_select %p28, 0, %s27
      %s30 = sadd.s32 1, %s21
      %s31 = scalar_select %p28, %s30, %s21
      %p32 = scmp.ge.s32.totalorder %s31, 2
      %s33 = scalar_select %p32, 0, %s31
      %s34 = ssub.s32 %s21, %s33
      %s35 = ssub.s32 %s22, %s29
      %s36 = sor.u32 %s34, %s35
      %p37 = scmp.eq.s32.totalorder %s36, 0
      %s39 = sadd.s32 %s38, 1
      %s40 = scalar_select %p37, %s38, %s39
      %p43 = pneg %p37
      %p44 = scmp.eq.s32.totalorder %s14, 1
      %p45 = por %p43, %p44
      %p46 = scmp.ne.s32.totalorder %s38, %s41
      %p47 = scmp.eq.s32.totalorder %s14, 0
      %p48 = por %p46, %p47
      %p49 = scmp.ne.s32.totalorder %s38, %s41
      %p50 = scmp.eq.s32.totalorder %s19, 1
      %p51 = por %p49, %p50
      %p52 = scmp.ne.s32.totalorder %s41, %s42
      %p53 = scmp.eq.s32.totalorder %s19, 0
      %p54 = por %p52, %p53
      %p55 = scmp.ne.s32.totalorder %s41, %s42
      %p56 = scmp.eq.s32.totalorder %s20, 1
      %p57 = por %p55, %p56
      %p59 = scmp.ne.s32.totalorder %s42, %s58
      %p60 = scmp.eq.s32.totalorder %s20, 0
      %p61 = por %p59, %p60
      %s62 = ssub.s32 %s21, %s33
      %s63 = ssub.s32 %s22, %s29
      %s64 = sor.u32 %s62, %s63
      %p65 = scmp.eq.s32.totalorder %s64, 0
      %s67 = sadd.s32 %s66, 1
      %s68 = scalar_select %p65, %s66, %s67
      %p71 = pneg %p65
      %p72 = scmp.eq.s32.totalorder %s14, 1
      %p73 = por %p71, %p72
      %p74 = scmp.ne.s32.totalorder %s66, %s69
      %p75 = scmp.eq.s32.totalorder %s14, 0
      %p76 = por %p74, %p75
      %p77 = scmp.ne.s32.totalorder %s66, %s69
      %p78 = scmp.eq.s32.totalorder %s19, 1
      %p79 = por %p77, %p78
      %p80 = scmp.ne.s32.totalorder %s69, %s70
      %p81 = scmp.eq.s32.totalorder %s19, 0
      %p82 = por %p80, %p81
      %p83 = scmp.ne.s32.totalorder %s69, %s70
      %p84 = scmp.eq.s32.totalorder %s20, 1
      %p85 = por %p83, %p84
      %p87 = scmp.ne.s32.totalorder %s70, %s86
      %p88 = scmp.eq.s32.totalorder %s20, 0
      %p89 = por %p87, %p88
      %s90 = ssub.s32 %s21, %s33
      %s91 = ssub.s32 %s22, %s29
      %s92 = sor.u32 %s90, %s91
      %p93 = scmp.eq.s32.totalorder %s92, 0
      %s95 = sadd.s32 %s94, 1
      %s96 = scalar_select %p93, %s94, %s95
      %p99 = pneg %p93
      %p100 = scmp.eq.s32.totalorder %s14, 1
      %p101 = por %p99, %p100
      %p102 = scmp.ne.s32.totalorder %s94, %s97
      %p103 = scmp.eq.s32.totalorder %s14, 0
      %p104 = por %p102, %p103
      %p105 = scmp.ne.s32.totalorder %s94, %s97
      %p106 = scmp.eq.s32.totalorder %s19, 1
      %p107 = por %p105, %p106
      %p108 = scmp.ne.s32.totalorder %s97, %s98
      %p109 = scmp.eq.s32.totalorder %s19, 0
      %p110 = por %p108, %p109
      %p111 = scmp.ne.s32.totalorder %s97, %s98
      %p112 = scmp.eq.s32.totalorder %s20, 1
      %p113 = por %p111, %p112
      %p115 = scmp.ne.s32.totalorder %s98, %s114
      %p116 = scmp.eq.s32.totalorder %s20, 0
      %p117 = por %p115, %p116
      %s119 = sadd.s32 %s118, 1
      %p122 = scmp.eq.s32.totalorder %s14, 1
      %p123 = scmp.ne.s32.totalorder %s118, %s120
      %p124 = scmp.eq.s32.totalorder %s14, 0
      %p125 = por %p123, %p124
      %p126 = scmp.ne.s32.totalorder %s118, %s120
      %p127 = scmp.eq.s32.totalorder %s19, 1
      %p128 = por %p126, %p127
      %p129 = scmp.ne.s32.totalorder %s120, %s121
      %p130 = scmp.eq.s32.totalorder %s19, 0
      %p131 = por %p129, %p130
      %p132 = scmp.ne.s32.totalorder %s120, %s121
      %p133 = scmp.eq.s32.totalorder %s20, 1
      %p134 = por %p132, %p133
      %p136 = scmp.ne.s32.totalorder %s121, %s135
      %p137 = scmp.eq.s32.totalorder %s20, 0
      %p138 = por %p136, %p137
      %s140 = sadd.s32 %s139, 1
      %p143 = scmp.eq.s32.totalorder %s14, 1
      %p144 = scmp.ne.s32.totalorder %s139, %s141
      %p145 = scmp.eq.s32.totalorder %s14, 0
      %p146 = por %p144, %p145
      %p147 = scmp.ne.s32.totalorder %s139, %s141
      %p148 = scmp.eq.s32.totalorder %s19, 1
      %p149 = por %p147, %p148
      %p150 = scmp.ne.s32.totalorder %s141, %s142
      %p151 = scmp.eq.s32.totalorder %s19, 0
      %p152 = por %p150, %p151
      %p153 = scmp.ne.s32.totalorder %s141, %s142
      %p154 = scmp.eq.s32.totalorder %s20, 1
      %p155 = por %p153, %p154
      %p157 = scmp.ne.s32.totalorder %s142, %s156
      %p158 = scmp.eq.s32.totalorder %s20, 0
      %p159 = por %p157, %p158
      %s160 = ssub.s32 %s21, %s33
      %s161 = ssub.s32 %s22, %s29
      %s162 = sor.u32 %s160, %s161
      %p163 = scmp.eq.s32.totalorder %s162, 0
      %s165 = sadd.s32 %s164, 1
      %s166 = scalar_select %p163, %s164, %s165
      %p169 = pneg %p163
      %p170 = scmp.eq.s32.totalorder %s14, 1
      %p171 = por %p169, %p170
      %p172 = scmp.ne.s32.totalorder %s164, %s167
      %p173 = scmp.eq.s32.totalorder %s14, 0
      %p174 = por %p172, %p173
      %p175 = scmp.ne.s32.totalorder %s164, %s167
      %p176 = scmp.eq.s32.totalorder %s19, 1
      %p177 = por %p175, %p176
      %p178 = scmp.ne.s32.totalorder %s167, %s168
      %p179 = scmp.eq.s32.totalorder %s19, 0
      %p180 = por %p178, %p179
      %p181 = scmp.ne.s32.totalorder %s167, %s168
      %p182 = scmp.eq.s32.totalorder %s20, 1
      %p183 = por %p181, %p182
      %p185 = scmp.ne.s32.totalorder %s168, %s184
      %p186 = scmp.eq.s32.totalorder %s20, 0
      %p187 = por %p185, %p186
      %p188 = scmp.le.s32.totalorder 1, %s14
      %p189 = scmp.lt.s32.totalorder %s14, 3
      %p190 = pnand %p188, %p189
      %p191 = pneg %p190
      // Predicated region
      $region9: #{tpu_custom_call.1} parent=5 // pred_check
        _
      $region10: #{tpu_custom_call.1} parent=5 // pred_check_branch
        %193 = sbr.rel (%p190) target = $region12
      $region11: #{tpu_custom_call.1} parent=5 // pred_region
        %s194 = ssub.s32 %s14, 1
        // Predicated region
        $region13: #{tpu_custom_call.1} parent=11 // pred_check
          %p195 = pneg %p131
        $region14: #{tpu_custom_call.1} parent=11 // pred_check_branch
          %197 = sbr.rel (%p195) target = $region16
        $region15: #{tpu_custom_call.1} parent=11 // pred_region
          _
        $region16: #{tpu_custom_call.1} parent=11 // pred_fallthru
          _
        // Predicated region
        $region17: #{tpu_custom_call.1} parent=11 // pred_check
          %p198 = pneg %p152
        $region18: #{tpu_custom_call.1} parent=11 // pred_check_branch
          %200 = sbr.rel (%p198) target = $region20
        $region19: #{tpu_custom_call.1} parent=11 // pred_region
          _
        $region20: #{tpu_custom_call.1} parent=11 // pred_fallthru
          _
      $region12: #{tpu_custom_call.1} parent=5 // pred_fallthru
        _
      %p201 = scmp.lt.s32.totalorder %s14, 2
      // Predicated region
      $region21: #{tpu_custom_call.1} parent=5 // pred_check
        %p202 = pneg %p201
      $region22: #{tpu_custom_call.1} parent=5 // pred_check_branch
        %204 = sbr.rel (%p202) target = $region24
      $region23: #{tpu_custom_call.1} parent=5 // pred_region
        // Predicated region
        $region25: #{tpu_custom_call.1} parent=23 // pred_check
          %p205 = pneg %p48
        $region26: #{tpu_custom_call.1} parent=23 // pred_check_branch
          %207 = sbr.rel (%p205) target = $region28
        $region27: #{tpu_custom_call.1} parent=23 // pred_region
          %p208 = scmp.lt.s32.totalorder %s21, 1
          %s209 = scalar_select %p208, %s21, 1
          %p210 = scmp.lt.s32.totalorder %s22, 0
          %s211 = scalar_select %p210, %s22, 0
          %s212 = smul.addr %s209, 8
          %s213 = sadd.s32 %s211, %s212
          %s214 = smul.addr %s213, 8
          %s215 = scalar_lea.vmem %s0, %s214
        $region28: #{tpu_custom_call.1} parent=23 // pred_fallthru
          _
        // Predicated region
        $region29: #{tpu_custom_call.1} parent=23 // pred_check
          %p216 = pneg %p76
        $region30: #{tpu_custom_call.1} parent=23 // pred_check_branch
          %218 = sbr.rel (%p216) target = $region32
        $region31: #{tpu_custom_call.1} parent=23 // pred_region
          %p219 = scmp.lt.s32.totalorder %s21, 1
          %s220 = scalar_select %p219, %s21, 1
          %p221 = scmp.lt.s32.totalorder %s22, 0
          %s222 = scalar_select %p221, %s22, 0
          %s223 = smul.addr %s220, 8
          %s224 = sadd.s32 %s222, %s223
          %s225 = smul.addr %s224, 8
          %s226 = scalar_lea.vmem %s1, %s225
        $region32: #{tpu_custom_call.1} parent=23 // pred_fallthru
          _
        // Predicated region
        $region33: #{tpu_custom_call.1} parent=23 // pred_check
          %p227 = pneg %p104
        $region34: #{tpu_custom_call.1} parent=23 // pred_check_branch
          %229 = sbr.rel (%p227) target = $region36
        $region35: #{tpu_custom_call.1} parent=23 // pred_region
          %p230 = scmp.lt.s32.totalorder %s21, 1
          %s231 = scalar_select %p230, %s21, 1
          %p232 = scmp.lt.s32.totalorder %s22, 0
          %s233 = scalar_select %p232, %s22, 0
          %s234 = smul.addr %s231, 8
          %s235 = sadd.s32 %s233, %s234
          %s236 = smul.addr %s235, 8
          %s237 = scalar_lea.vmem %s2, %s236
        $region36: #{tpu_custom_call.1} parent=23 // pred_fallthru
          _
      $region24: #{tpu_custom_call.1} parent=5 // pred_fallthru
        _
      %p238 = scmp.le.s32.totalorder 1, %s14
      %p239 = scmp.lt.s32.totalorder %s14, 3
      %p240 = pnand %p238, %p239
      %p241 = pneg %p240
      // Predicated region
      $region37: #{tpu_custom_call.1} parent=5 // pred_check
        _
      $region38: #{tpu_custom_call.1} parent=5 // pred_check_branch
        %243 = sbr.rel (%p240) target = $region40
      $region39: #{tpu_custom_call.1} parent=5 // pred_region
        %s244 = ssub.s32 %s14, 1
        %p245 = scmp.lt.s32.totalorder %s23, 1
        %s246 = scalar_select %p245, %s23, 1
        %p247 = scmp.lt.s32.totalorder %s24, 0
        %s248 = scalar_select %p247, %s24, 0
        %s249 = smul.addr %s246, 8
        %s250 = sadd.s32 %s248, %s249
        %s251 = smul.addr %s250, 8
        %s252 = scalar_lea.vmem %s0, %s251
        %p253 = pneg %p54
        %p254 = pneg %p51
        %p255 = scmp.lt.s32.totalorder %s23, 1
        %s256 = scalar_select %p255, %s23, 1
        %p257 = scmp.lt.s32.totalorder %s24, 0
        %s258 = scalar_select %p257, %s24, 0
        %s259 = smul.addr %s256, 8
        %s260 = sadd.s32 %s258, %s259
        %s261 = smul.addr %s260, 8
        %s262 = scalar_lea.vmem %s1, %s261
        %p263 = pneg %p82
        %p264 = pneg %p79
        %p265 = scmp.lt.s32.totalorder %s23, 1
        %s266 = scalar_select %p265, %s23, 1
        %p267 = scmp.lt.s32.totalorder %s24, 0
        %s268 = scalar_select %p267, %s24, 0
        %s269 = smul.addr %s266, 8
        %s270 = sadd.s32 %s268, %s269
        %s271 = smul.addr %s270, 8
        %s272 = scalar_lea.vmem %s2, %s271
        %p273 = pneg %p110
        %p274 = pneg %p107
        %p275 = pneg %p131
        %p276 = pneg %p128
        %p277 = pneg %p152
        %p278 = pneg %p149
        %p279 = pneg %p180
        %p280 = pneg %p177
        %s281 = sand.u32 %s167, 1
        %s282 = scalar_lea.sflag [#allocation3], %s281
        %s283 = sand.u32 %s167, 1
        %s284 = smul.addr %s283, 96
        %s285 = scalar_lea.vmem [#allocation2], %s284
        %p286 = scmp.lt.s32.totalorder %s23, 1
        %s287 = scalar_select %p286, %s23, 1
        %p288 = scmp.lt.s32.totalorder %s24, 0
        %s289 = scalar_select %p288, %s24, 0
        %s290 = smul.addr %s287, 8
        %s291 = sadd.s32 %s289, %s290
        %s292 = smul.addr %s291, 8
        %s293 = scalar_lea.vmem %s0, %s292
        %p294 = scmp.lt.s32.totalorder %s23, 1
        %s295 = scalar_select %p294, %s23, 1
        %p296 = scmp.lt.s32.totalorder %s24, 0
        %s297 = scalar_select %p296, %s24, 0
        %s298 = smul.addr %s295, 8
        %s299 = sadd.s32 %s297, %s298
        %s300 = smul.addr %s299, 8
        %s301 = scalar_lea.vmem %s1, %s300
        %p302 = scmp.lt.s32.totalorder %s23, 1
        %s303 = scalar_select %p302, %s23, 1
        %p304 = scmp.lt.s32.totalorder %s24, 0
        %s305 = scalar_select %p304, %s24, 0
        %s306 = smul.addr %s303, 8
        %s307 = sadd.s32 %s305, %s306
        %s308 = smul.addr %s307, 8
        %s309 = scalar_lea.vmem %s2, %s308
        %v310 = vld [vmem:[%s3] sm:$0xff]
        %v311 = vld [vmem:[%s3 + $0x8] sm:$0xff]
        %v312 = vld [vmem:[%s3 + $0x10] sm:$0xff]
        %v313 = vld [vmem:[%s3 + $0x18] sm:$0xff]
        %v314 = vld [vmem:[%s3 + $0x20] sm:$0xff]
        %v315 = vld [vmem:[%s3 + $0x28] sm:$0xff]
        %v316 = vld [vmem:[%s3 + $0x30] sm:$0xff]
        %v317 = vld [vmem:[%s3 + $0x38] sm:$0xff]
        %v318 = vld [vmem:[%s3 + $0x40] sm:$0xff]
        %v319 = vld [vmem:[%s3 + $0x48] sm:$0xff]
        %v320 = vld [vmem:[%s3 + $0x50] sm:$0xff]
        %v321 = vld [vmem:[%s3 + $0x58] sm:$0xff]
        %v322 = vld [vmem:[%s293] sm:$0xff]
        %v323 = vld [vmem:[%s293 + $0x8] sm:$0xff]
        %v324 = vld [vmem:[%s293 + $0x10] sm:$0xff]
        %v325 = vld [vmem:[%s293 + $0x18] sm:$0xff]
        %v326 = vld [vmem:[%s293 + $0x20] sm:$0xff]
        %v327 = vld [vmem:[%s293 + $0x28] sm:$0xff]
        %v328 = vld [vmem:[%s293 + $0x30] sm:$0xff]
        %v329 = vld [vmem:[%s293 + $0x38] sm:$0xff]
        %s330 = scalar_lea.vmem %s3, 96
        %v331 = vld [vmem:[%s330] sm:$0xff]
        %v332 = vld [vmem:[%s330 + $0x8] sm:$0xff]
        %v333 = vld [vmem:[%s330 + $0x10] sm:$0xff]
        %v334 = vld [vmem:[%s330 + $0x18] sm:$0xff]
        %v335 = vld [vmem:[%s330 + $0x20] sm:$0xff]
        %v336 = vld [vmem:[%s330 + $0x28] sm:$0xff]
        %v337 = vld [vmem:[%s330 + $0x30] sm:$0xff]
        %v338 = vld [vmem:[%s330 + $0x38] sm:$0xff]
        %v339 = vld [vmem:[%s330 + $0x40] sm:$0xff]
        %v340 = vld [vmem:[%s330 + $0x48] sm:$0xff]
        %v341 = vld [vmem:[%s330 + $0x50] sm:$0xff]
        %v342 = vld [vmem:[%s330 + $0x58] sm:$0xff]
        %v343 = vld [vmem:[%s301] sm:$0xff]
        %v344 = vld [vmem:[%s301 + $0x8] sm:$0xff]
        %v345 = vld [vmem:[%s301 + $0x10] sm:$0xff]
        %v346 = vld [vmem:[%s301 + $0x18] sm:$0xff]
        %v347 = vld [vmem:[%s301 + $0x20] sm:$0xff]
        %v348 = vld [vmem:[%s301 + $0x28] sm:$0xff]
        %v349 = vld [vmem:[%s301 + $0x30] sm:$0xff]
        %v350 = vld [vmem:[%s301 + $0x38] sm:$0xff]
        %vm351 = vcmask 523264
        %v353 = vsel %vm351, %v331, 0
        %v356 = vsel %vm351, %v332, 0
        %v359 = vsel %vm351, %v333, 0
        %v362 = vsel %vm351, %v334, 0
        %v365 = vsel %vm351, %v335, 0
        %v368 = vsel %vm351, %v336, 0
        %v371 = vsel %vm351, %v337, 0
        %v374 = vsel %vm351, %v338, 0
        %v377 = vsel %vm351, %v339, 0
        %v380 = vsel %vm351, %v340, 0
        %v383 = vsel %vm351, %v341, 0
        %v386 = vsel %vm351, %v342, 0
        %388 = vmatpush.msra.mxu0 0.0
        %389 = vmatpush.msra.mxu0 0.0
        %390 = vmatpush.msra.mxu0 0.0
        %391 = vmatpush.msra.mxu0 0.0
        %392 = vmatpush.msra.mxu0 0.0
        %393 = vmatpush.msra.mxu0 0.0
        %394 = vmatpush.msra.mxu0 0.0
        %395 = vmatpush.msra.mxu0 0.0
        %396 = vmatpush.msra.mxu0 %v350
        %397 = vmatpush.msra.mxu0 %v349
        %398 = vmatpush.msra.mxu0 %v348
        %399 = vmatpush.msra.mxu0 %v347
        %400 = vmatpush.msra.mxu0 %v346
        %401 = vmatpush.msra.mxu0 %v345
        %402 = vmatpush.msra.mxu0 %v344
        %403 = vmatpush.msra.mxu0 %v343
        %404 = vmatmul.f32.gmra.mxu0 %v353
        %v405 = vpop.f32.mrf.mxu0
        %v406 = vadd.f32 0.0, %v405
        %407 = vmatmul.f32.gmra.mxu0 %v356
        %v408 = vpop.f32.mrf.mxu0
        %v409 = vadd.f32 0.0, %v408
        %410 = vmatmul.f32.gmra.mxu0 %v359
        %v411 = vpop.f32.mrf.mxu0
        %v412 = vadd.f32 0.0, %v411
        %413 = vmatmul.f32.gmra.mxu0 %v362
        %v414 = vpop.f32.mrf.mxu0
        %v415 = vadd.f32 0.0, %v414
        %416 = vmatmul.f32.gmra.mxu0 %v365
        %v417 = vpop.f32.mrf.mxu0
        %v418 = vadd.f32 0.0, %v417
        %419 = vmatmul.f32.gmra.mxu0 %v368
        %v420 = vpop.f32.mrf.mxu0
        %v421 = vadd.f32 0.0, %v420
        %422 = vmatmul.f32.gmra.mxu0 %v371
        %v423 = vpop.f32.mrf.mxu0
        %v424 = vadd.f32 0.0, %v423
        %425 = vmatmul.f32.gmra.mxu0 %v374
        %v426 = vpop.f32.mrf.mxu0
        %v427 = vadd.f32 0.0, %v426
        %428 = vmatmul.f32.gmra.mxu0 %v377
        %v429 = vpop.f32.mrf.mxu0
        %v430 = vadd.f32 0.0, %v429
        %431 = vmatmul.f32.gmra.mxu0 %v380
        %v432 = vpop.f32.mrf.mxu0
        %v433 = vadd.f32 0.0, %v432
        %434 = vmatmul.f32.gmra.mxu0 %v383
        %v435 = vpop.f32.mrf.mxu0
        %v436 = vadd.f32 0.0, %v435
        %437 = vmatmul.f32.gmra.mxu0 %v386
        %v438 = vpop.f32.mrf.mxu0
        %v439 = vadd.f32 0.0, %v438
        %440 = vdwg.mxu0
        %v442 = vsel %vm351, %v310, 0
        %v445 = vsel %vm351, %v311, 0
        %v448 = vsel %vm351, %v312, 0
        %v451 = vsel %vm351, %v313, 0
        %v454 = vsel %vm351, %v314, 0
        %v457 = vsel %vm351, %v315, 0
        %v460 = vsel %vm351, %v316, 0
        %v463 = vsel %vm351, %v317, 0
        %v466 = vsel %vm351, %v318, 0
        %v469 = vsel %vm351, %v319, 0
        %v472 = vsel %vm351, %v320, 0
        %v475 = vsel %vm351, %v321, 0
        %477 = vmatpush.msra.mxu0 0.0
        %478 = vmatpush.msra.mxu0 0.0
        %479 = vmatpush.msra.mxu0 0.0
        %480 = vmatpush.msra.mxu0 0.0
        %481 = vmatpush.msra.mxu0 0.0
        %482 = vmatpush.msra.mxu0 0.0
        %483 = vmatpush.msra.mxu0 0.0
        %484 = vmatpush.msra.mxu0 0.0
        %485 = vmatpush.msra.mxu0 %v329
        %486 = vmatpush.msra.mxu0 %v328
        %487 = vmatpush.msra.mxu0 %v327
        %488 = vmatpush.msra.mxu0 %v326
        %489 = vmatpush.msra.mxu0 %v325
        %490 = vmatpush.msra.mxu0 %v324
        %491 = vmatpush.msra.mxu0 %v323
        %492 = vmatpush.msra.mxu0 %v322
        %493 = vmatmul.f32.gmra.mxu0 %v442
        %v494 = vpop.f32.mrf.mxu0
        %v495 = vadd.f32 %v406, %v494
        %496 = vmatmul.f32.gmra.mxu0 %v445
        %v497 = vpop.f32.mrf.mxu0
        %v498 = vadd.f32 %v409, %v497
        %499 = vmatmul.f32.gmra.mxu0 %v448
        %v500 = vpop.f32.mrf.mxu0
        %v501 = vadd.f32 %v412, %v500
        %502 = vmatmul.f32.gmra.mxu0 %v451
        %v503 = vpop.f32.mrf.mxu0
        %v504 = vadd.f32 %v415, %v503
        %505 = vmatmul.f32.gmra.mxu0 %v454
        %v506 = vpop.f32.mrf.mxu0
        %v507 = vadd.f32 %v418, %v506
        %508 = vmatmul.f32.gmra.mxu0 %v457
        %v509 = vpop.f32.mrf.mxu0
        %v510 = vadd.f32 %v421, %v509
        %511 = vmatmul.f32.gmra.mxu0 %v460
        %v512 = vpop.f32.mrf.mxu0
        %v513 = vadd.f32 %v424, %v512
        %514 = vmatmul.f32.gmra.mxu0 %v463
        %v515 = vpop.f32.mrf.mxu0
        %v516 = vadd.f32 %v427, %v515
        %517 = vmatmul.f32.gmra.mxu0 %v466
        %v518 = vpop.f32.mrf.mxu0
        %v519 = vadd.f32 %v430, %v518
        %520 = vmatmul.f32.gmra.mxu0 %v469
        %v521 = vpop.f32.mrf.mxu0
        %v522 = vadd.f32 %v433, %v521
        %523 = vmatmul.f32.gmra.mxu0 %v472
        %v524 = vpop.f32.mrf.mxu0
        %v525 = vadd.f32 %v436, %v524
        %526 = vmatmul.f32.gmra.mxu0 %v475
        %v527 = vpop.f32.mrf.mxu0
        %v528 = vadd.f32 %v439, %v527
        %529 = vdwg.mxu0
        %s530 = scalar_lea.vmem %s3, 192
        %v531 = vld [vmem:[%s530] sm:$0xff]
        %v532 = vld [vmem:[%s530 + $0x8] sm:$0xff]
        %v533 = vld [vmem:[%s530 + $0x10] sm:$0xff]
        %v534 = vld [vmem:[%s530 + $0x18] sm:$0xff]
        %v535 = vld [vmem:[%s530 + $0x20] sm:$0xff]
        %v536 = vld [vmem:[%s530 + $0x28] sm:$0xff]
        %v537 = vld [vmem:[%s530 + $0x30] sm:$0xff]
        %v538 = vld [vmem:[%s530 + $0x38] sm:$0xff]
        %v539 = vld [vmem:[%s530 + $0x40] sm:$0xff]
        %v540 = vld [vmem:[%s530 + $0x48] sm:$0xff]
        %v541 = vld [vmem:[%s530 + $0x50] sm:$0xff]
        %v542 = vld [vmem:[%s530 + $0x58] sm:$0xff]
        %v543 = vld [vmem:[%s309] sm:$0xff]
        %v544 = vld [vmem:[%s309 + $0x8] sm:$0xff]
        %v545 = vld [vmem:[%s309 + $0x10] sm:$0xff]
        %v546 = vld [vmem:[%s309 + $0x18] sm:$0xff]
        %v547 = vld [vmem:[%s309 + $0x20] sm:$0xff]
        %v548 = vld [vmem:[%s309 + $0x28] sm:$0xff]
        %v549 = vld [vmem:[%s309 + $0x30] sm:$0xff]
        %v550 = vld [vmem:[%s309 + $0x38] sm:$0xff]
        %v552 = vsel %vm351, %v531, 0
        %v555 = vsel %vm351, %v532, 0
        %v558 = vsel %vm351, %v533, 0
        %v561 = vsel %vm351, %v534, 0
        %v564 = vsel %vm351, %v535, 0
        %v567 = vsel %vm351, %v536, 0
        %v570 = vsel %vm351, %v537, 0
        %v573 = vsel %vm351, %v538, 0
        %v576 = vsel %vm351, %v539, 0
        %v579 = vsel %vm351, %v540, 0
        %v582 = vsel %vm351, %v541, 0
        %v585 = vsel %vm351, %v542, 0
        %587 = vmatpush.msra.mxu0 0.0
        %588 = vmatpush.msra.mxu0 0.0
        %589 = vmatpush.msra.mxu0 0.0
        %590 = vmatpush.msra.mxu0 0.0
        %591 = vmatpush.msra.mxu0 0.0
        %592 = vmatpush.msra.mxu0 0.0
        %593 = vmatpush.msra.mxu0 0.0
        %594 = vmatpush.msra.mxu0 0.0
        %595 = vmatpush.msra.mxu0 %v550
        %596 = vmatpush.msra.mxu0 %v549
        %597 = vmatpush.msra.mxu0 %v548
        %598 = vmatpush.msra.mxu0 %v547
        %599 = vmatpush.msra.mxu0 %v546
        %600 = vmatpush.msra.mxu0 %v545
        %601 = vmatpush.msra.mxu0 %v544
        %602 = vmatpush.msra.mxu0 %v543
        %603 = vmatmul.f32.gmra.mxu0 %v552
        %v604 = vpop.f32.mrf.mxu0
        %v605 = vadd.f32 0.0, %v604
        %606 = vmatmul.f32.gmra.mxu0 %v555
        %v607 = vpop.f32.mrf.mxu0
        %v608 = vadd.f32 0.0, %v607
        %609 = vmatmul.f32.gmra.mxu0 %v558
        %v610 = vpop.f32.mrf.mxu0
        %v611 = vadd.f32 0.0, %v610
        %612 = vmatmul.f32.gmra.mxu0 %v561
        %v613 = vpop.f32.mrf.mxu0
        %v614 = vadd.f32 0.0, %v613
        %615 = vmatmul.f32.gmra.mxu0 %v564
        %v616 = vpop.f32.mrf.mxu0
        %v617 = vadd.f32 0.0, %v616
        %618 = vmatmul.f32.gmra.mxu0 %v567
        %v619 = vpop.f32.mrf.mxu0
        %v620 = vadd.f32 0.0, %v619
        %621 = vmatmul.f32.gmra.mxu0 %v570
        %v622 = vpop.f32.mrf.mxu0
        %v623 = vadd.f32 0.0, %v622
        %624 = vmatmul.f32.gmra.mxu0 %v573
        %v625 = vpop.f32.mrf.mxu0
        %v626 = vadd.f32 0.0, %v625
        %627 = vmatmul.f32.gmra.mxu0 %v576
        %v628 = vpop.f32.mrf.mxu0
        %v629 = vadd.f32 0.0, %v628
        %630 = vmatmul.f32.gmra.mxu0 %v579
        %v631 = vpop.f32.mrf.mxu0
        %v632 = vadd.f32 0.0, %v631
        %633 = vmatmul.f32.gmra.mxu0 %v582
        %v634 = vpop.f32.mrf.mxu0
        %v635 = vadd.f32 0.0, %v634
        %636 = vmatmul.f32.gmra.mxu0 %v585
        %v637 = vpop.f32.mrf.mxu0
        %v638 = vadd.f32 0.0, %v637
        %639 = vdwg.mxu0
        %v640 = vadd.f32 %v495, %v605
        %v641 = vadd.f32 %v498, %v608
        %v642 = vadd.f32 %v501, %v611
        %v643 = vadd.f32 %v504, %v614
        %v644 = vadd.f32 %v507, %v617
        %v645 = vadd.f32 %v510, %v620
        %v646 = vadd.f32 %v513, %v623
        %v647 = vadd.f32 %v516, %v626
        %v648 = vadd.f32 %v519, %v629
        %v649 = vadd.f32 %v522, %v632
        %v650 = vadd.f32 %v525, %v635
        %v651 = vadd.f32 %v528, %v638
        %v652 = vld [vmem:[%s4] sm:$0xff]
        %v653 = vld [vmem:[%s4 + $0x8] sm:$0xff]
        %v654 = vld [vmem:[%s4 + $0x10] sm:$0xff]
        %v655 = vld [vmem:[%s4 + $0x18] sm:$0xff]
        %v656 = vld [vmem:[%s4 + $0x20] sm:$0xff]
        %v657 = vld [vmem:[%s4 + $0x28] sm:$0xff]
        %v658 = vld [vmem:[%s4 + $0x30] sm:$0xff]
        %v659 = vld [vmem:[%s4 + $0x38] sm:$0xff]
        %v660 = vld [vmem:[%s4 + $0x40] sm:$0xff]
        %v661 = vld [vmem:[%s4 + $0x48] sm:$0xff]
        %v662 = vld [vmem:[%s4 + $0x50] sm:$0xff]
        %v663 = vld [vmem:[%s4 + $0x58] sm:$0xff]
        %665 = vset.pattern.permute.xlu0 0
        %666 = vperm.xlu0 %665, %v652
        %v667 = vpop.permute.xlu0 %666
        %670 = vset.pattern.permute.xlu0 0
        %671 = vperm.xlu0 %670, %v653
        %v672 = vpop.permute.xlu0 %671
        %675 = vset.pattern.permute.xlu0 0
        %676 = vperm.xlu0 %675, %v654
        %v677 = vpop.permute.xlu0 %676
        %680 = vset.pattern.permute.xlu0 0
        %681 = vperm.xlu0 %680, %v655
        %v682 = vpop.permute.xlu0 %681
        %685 = vset.pattern.permute.xlu0 0
        %686 = vperm.xlu0 %685, %v656
        %v687 = vpop.permute.xlu0 %686
        %690 = vset.pattern.permute.xlu0 0
        %691 = vperm.xlu0 %690, %v657
        %v692 = vpop.permute.xlu0 %691
        %695 = vset.pattern.permute.xlu0 0
        %696 = vperm.xlu0 %695, %v658
        %v697 = vpop.permute.xlu0 %696
        %700 = vset.pattern.permute.xlu0 0
        %701 = vperm.xlu0 %700, %v659
        %v702 = vpop.permute.xlu0 %701
        %705 = vset.pattern.permute.xlu0 0
        %706 = vperm.xlu0 %705, %v660
        %v707 = vpop.permute.xlu0 %706
        %710 = vset.pattern.permute.xlu0 0
        %711 = vperm.xlu0 %710, %v661
        %v712 = vpop.permute.xlu0 %711
        %715 = vset.pattern.permute.xlu0 0
        %716 = vperm.xlu0 %715, %v662
        %v717 = vpop.permute.xlu0 %716
        %720 = vset.pattern.permute.xlu0 0
        %721 = vperm.xlu0 %720, %v663
        %v722 = vpop.permute.xlu0 %721
        %v724 = vadd.f32 %v640, %v667
        %v725 = vadd.f32 %v641, %v672
        %v726 = vadd.f32 %v642, %v677
        %v727 = vadd.f32 %v643, %v682
        %v728 = vadd.f32 %v644, %v687
        %v729 = vadd.f32 %v645, %v692
        %v730 = vadd.f32 %v646, %v697
        %v731 = vadd.f32 %v647, %v702
        %v732 = vadd.f32 %v648, %v707
        %v733 = vadd.f32 %v649, %v712
        %v734 = vadd.f32 %v650, %v717
        %v735 = vadd.f32 %v651, %v722
        %736 = vst [vmem:[%s285] sm:$0xff] %v724
        %737 = vst [vmem:[%s285 + $0x8] sm:$0xff] %v725
        %738 = vst [vmem:[%s285 + $0x10] sm:$0xff] %v726
        %739 = vst [vmem:[%s285 + $0x18] sm:$0xff] %v727
        %740 = vst [vmem:[%s285 + $0x20] sm:$0xff] %v728
        %741 = vst [vmem:[%s285 + $0x28] sm:$0xff] %v729
        %742 = vst [vmem:[%s285 + $0x30] sm:$0xff] %v730
        %743 = vst [vmem:[%s285 + $0x38] sm:$0xff] %v731
        %744 = vst [vmem:[%s285 + $0x40] sm:$0xff] %v732
        %745 = vst [vmem:[%s285 + $0x48] sm:$0xff] %v733
        %746 = vst [vmem:[%s285 + $0x50] sm:$0xff] %v734
        %747 = vst [vmem:[%s285 + $0x58] sm:$0xff] %v735
        %s748 = sand.u32 %s167, 1
        %s749 = scalar_lea.sflag [#allocation3], %s748
        %s750 = sand.u32 %s167, 1
        %s751 = smul.addr %s750, 96
        %s752 = scalar_lea.vmem [#allocation2], %s751
        // Predicated region
        $region41: #{tpu_custom_call.1} parent=39 // pred_check
          %p753 = pneg %p177
        $region42: #{tpu_custom_call.1} parent=39 // pred_check_branch
          %755 = sbr.rel (%p753) target = $region44
        $region43: #{tpu_custom_call.1} parent=39 // pred_region
          %757 = vsyncadd %s749, 0
          %s758 = smul.addr %s23, 12
          %s759 = sadd.s32 %s24, %s758
          %s760 = smul.addr %s759, 8
          %s761 = scalar_lea.hbm %s5, %s760
          %s762 = sshll.u32 %s752, 4
          %s763 = int_to_ptr.vmem [resolvable:$true] %s762
          %s764 = sshll.u32 %s761, 4
          %s765 = int_to_ptr.hbm [resolvable:$true] %s764
          %770 = dma.vmem_to_hbm [thread:$0]  %s763, 1536, %s765, %s749, 128, 128, 8
        $region44: #{tpu_custom_call.1} parent=39 // pred_fallthru
          _
      $region40: #{tpu_custom_call.1} parent=5 // pred_fallthru
        _
      %p771 = scmp.le.s32.totalorder 2, %s14
      // Predicated region
      $region45: #{tpu_custom_call.1} parent=5 // pred_check
        %p772 = pneg %p771
      $region46: #{tpu_custom_call.1} parent=5 // pred_check_branch
        %774 = sbr.rel (%p772) target = $region48
      $region47: #{tpu_custom_call.1} parent=5 // pred_region
        %s775 = ssub.s32 %s14, 2
        // Predicated region
        $region49: #{tpu_custom_call.1} parent=47 // pred_check
          %p776 = pneg %p183
        $region50: #{tpu_custom_call.1} parent=47 // pred_check_branch
          %778 = sbr.rel (%p776) target = $region52
        $region51: #{tpu_custom_call.1} parent=47 // pred_region
          %s779 = sand.u32 %s168, 1
          %s780 = scalar_lea.sflag [#allocation3], %s779
          %s781 = sand.u32 %s168, 1
          %s782 = smul.addr %s781, 96
          %s783 = scalar_lea.vmem [#allocation2], %s782
          %785 = dma.done %s780, 1536
        $region52: #{tpu_custom_call.1} parent=47 // pred_fallthru
          _
      $region48: #{tpu_custom_call.1} parent=5 // pred_fallthru
        _
    $region6: #{tpu_custom_call.1} parent=1 // loop_footer
      %s18 = sadd.s32 1, %s14
    $region7: #{tpu_custom_call.1} parent=1 // loop_footer_branch
      %13 = sbr.rel target = $region3
    $region8: #{tpu_custom_call.1} parent=1 // loop_exit
      _
    %786 = vsyncpa [#allocation3], 1
    %s787 = scalar_lea.sflag [#allocation3], 1
    %788 = vsyncpa %s787, 1

</llo_original>
